<compile_context>
chip_gen: v6e
topology: v6e:2x2x1
jax: 0.10.0
libtpu: 0.0.40
codegen_flags: <defaults>
</compile_context>

<pallas_src>
import functools

import numpy as np
import jax
import jax.numpy as jnp
from jax.experimental import pallas as pl
from jax.experimental.pallas import tpu as pltpu


# ---------------- Pallas kernel ----------------
def _attention_kernel(x_ref, wqkv_ref, wo_ref, bias_ref, o_ref, qkv_s,
                      *, num_heads, q_tile):
    """One (batch element, q-tile) grid step of fused MHSA."""
    H = num_heads
    tq = q_tile
    N, three_c = qkv_s.shape
    C = three_c // 3
    dh = C // H
    qt = pl.program_id(1)

    # ---- packed qkv projection: one lane-dense (N,C)@(C,3C) bf16 MXU matmul,
    #      computed once per batch element (q-tile axis is "arbitrary"). ----
    @pl.when(qt == 0)
    def _():
        qkv_s[...] = jnp.dot(x_ref[0], wqkv_ref[...],
                             preferred_element_type=jnp.float32
                             ).astype(jnp.bfloat16)

    # ---- head-batched (H, ., dh) views built in registers: static lane slices
    #      of the packed qkv + stack along a new (untiled) leading axis.
    #      No per-head masked stores, no scratch relayout.  The 1/sqrt(dh)
    #      scale is already folded into the Q weight columns. ----
    row0 = pl.multiple_of(qt * tq, tq)
    q_rows = qkv_s[pl.ds(row0, tq), :]            # (tq, 3C) bf16 (this q tile)
    kv_rows = qkv_s[...]                          # (N, 3C) bf16 (all rows)
    q = jnp.stack([q_rows[:, 0 * C + h * dh: 0 * C + (h + 1) * dh]
                   for h in range(H)], axis=0)    # (H, tq, dh)
    k = jnp.stack([kv_rows[:, 1 * C + h * dh: 1 * C + (h + 1) * dh]
                   for h in range(H)], axis=0)    # (H, N, dh)
    v = jnp.stack([kv_rows[:, 2 * C + h * dh: 2 * C + (h + 1) * dh]
                   for h in range(H)], axis=0)    # (H, N, dh)

    # ---- scores + softmax (f32), head-batched bf16 MXU matmul ----
    s = jnp.einsum('hqd,hkd->hqk', q, k,
                   preferred_element_type=jnp.float32)            # (H, tq, N)
    s = s - jnp.max(s, axis=-1, keepdims=True)
    p = jnp.exp(s)
    p = p * pl.reciprocal(jnp.sum(p, axis=-1, keepdims=True), approx=True)

    # ---- attention output, head-batched bf16 MXU matmul ----
    ctx = jnp.einsum('hqk,hkd->hqd', p.astype(jnp.bfloat16), v,
                     preferred_element_type=jnp.float32)          # (H, tq, dh)

    # ---- output projection as a head-batched contraction (no concat scratch):
    #      sum_h ctx[h] @ W_proj[h*dh:(h+1)*dh, :]  ==  concat(ctx) @ W_proj ----
    out = jnp.einsum('hqd,hdc->hqc', ctx.astype(jnp.bfloat16), wo_ref[...],
                     preferred_element_type=jnp.float32).sum(axis=0)  # (tq, C)
    o_ref[0] = out + bias_ref[...]


# ---------------- wrapper ----------------
def attention(x, w_qkv, w_proj, b_proj, *, num_heads, q_tile=None):
    """Fused ViT multi-head self-attention.

    x: (B, N, C) f32 | w_qkv: (C, 3C) | w_proj: (C, C) | b_proj: (1, C)
    (w_qkv / w_proj are the *transposed* nn.Linear weights; qkv_bias=False,
     proj_bias=True, dropout p=0.0.)
    """
    B, N, C = x.shape
    assert C % num_heads == 0
    dh = C // num_heads

    if q_tile is None:
        q_tile = 128 if (N % 128 == 0 and N > 128) else N
    assert N % q_tile == 0, "q_tile must divide the sequence length"
    n_q = N // q_tile

    # Fold the 1/sqrt(dh) scale into the Q weight columns (scale on the Q side,
    # zero in-kernel cost), reshape the proj weight per head, cast to bf16.
    scale = dh ** -0.5
    w_qkv_s = jnp.concatenate([w_qkv[:, :C] * scale, w_qkv[:, C:]], axis=1)
    w_qkv_bf = w_qkv_s.astype(jnp.bfloat16)                  # (C, 3C)
    w_o_bf = w_proj.reshape(num_heads, dh, C).astype(jnp.bfloat16)
    x_bf = x.astype(jnp.bfloat16)
    b_proj = b_proj.astype(jnp.float32)

    # Explicit VMEM budget: double-buffered blocks + persistent packed-qkv
    # scratch + in-kernel live values, with headroom.  Floored so toy shapes
    # keep default behaviour; capped below v7x's 64 MiB physical VMEM.
    bytes_blocks = 2 * (N * C * 2 + q_tile * C * 4) \
        + 2 * (C * 3 * C * 2 + C * C * 2 + C * 4)
    bytes_scratch = N * 3 * C * 2
    bytes_values = num_heads * q_tile * N * 4 * 2 + num_heads * q_tile * C * 4
    vmem_limit = int(min(max(bytes_blocks + bytes_scratch + bytes_values
                             + (4 << 20), 16 << 20), 56 << 20))

    kernel = functools.partial(_attention_kernel,
                               num_heads=num_heads, q_tile=q_tile)

    return pl.pallas_call(
        kernel,
        out_shape=jax.ShapeDtypeStruct((B, N, C), jnp.float32),
        grid=(B, n_q),
        in_specs=[
            pl.BlockSpec((1, N, C), lambda b, qt: (b, 0, 0)),           # x (bf16)
            pl.BlockSpec((C, 3 * C), lambda b, qt: (0, 0)),             # W_qkv (bf16, scale folded)
            pl.BlockSpec((num_heads, dh, C), lambda b, qt: (0, 0, 0)),  # W_proj per head (bf16)
            pl.BlockSpec((1, C), lambda b, qt: (0, 0)),                 # proj bias (f32)
        ],
        out_specs=pl.BlockSpec((1, q_tile, C), lambda b, qt: (b, qt, 0)),
        scratch_shapes=[pltpu.VMEM((N, 3 * C), jnp.bfloat16)],          # packed qkv per batch elem
        compiler_params=pltpu.CompilerParams(
            dimension_semantics=("parallel", "arbitrary"),
            vmem_limit_bytes=vmem_limit),
    )(x_bf, w_qkv_bf, w_o_bf, b_proj)


# ---------------- pure-JAX reference (mirrors the torch forward, f32) ----------------
def attention_ref(x, w_qkv, w_proj, b_proj, num_heads):
    B, N, C = x.shape
    dh = C // num_heads
    qkv = jnp.einsum('bnc,cd->bnd', x, w_qkv)                       # (B, N, 3C)
    qkv = qkv.reshape(B, N, 3, num_heads, dh).transpose(2, 0, 3, 1, 4)
    q, k, v = qkv[0] * (dh ** -0.5), qkv[1], qkv[2]                 # (B, H, N, dh)
    attn = jnp.einsum('bhqd,bhkd->bhqk', q, k)
    attn = jax.nn.softmax(attn, axis=-1)
    out = jnp.einsum('bhqk,bhkd->bhqd', attn, v)
    out = out.transpose(0, 2, 1, 3).reshape(B, N, C)
    return jnp.einsum('bnc,cd->bnd', out, w_proj) + b_proj


if __name__ == "__main__":
    key = jax.random.PRNGKey(0)
    kx, kq, kp, kb = jax.random.split(key, 4)

    # small shapes: batch=2, seq=8, hidden=32, heads=4
    B, N, C, H = 2, 8, 32, 4
    x = jax.random.normal(kx, (B, N, C), jnp.float32)
    w_qkv = jax.random.normal(kq, (C, 3 * C), jnp.float32) * 0.05
    w_proj = jax.random.normal(kp, (C, C), jnp.float32) * 0.05
    b_proj = jax.random.normal(kb, (1, C), jnp.float32) * 0.05

    out = attention(x, w_qkv, w_proj, b_proj, num_heads=H)
    out = jax.block_until_ready(out)

    ref = attention_ref(x, w_qkv, w_proj, b_proj, H)
    assert out.shape == (B, N, C)
    # bf16 MXU operands + approx reciprocal: compare at a bf16-appropriate tolerance.
    np.testing.assert_allclose(np.asarray(out), np.asarray(ref), rtol=2e-2, atol=2e-2)
    print("KERNEL_OK")
</pallas_src>

<mosaic_0001>
module attributes {stable_mosaic.version = 11 : i64} {
  func.func @_attention_kernel(%arg0: i32, %arg1: i32, %arg2: memref<1x8x32xbf16, #tpu.memory_space<vmem>>, %arg3: memref<32x96xbf16, #tpu.memory_space<vmem>>, %arg4: memref<4x8x32xbf16, #tpu.memory_space<vmem>>, %arg5: memref<1x32xf32, #tpu.memory_space<vmem>>, %arg6: memref<1x8x32xf32, #tpu.memory_space<vmem>>, %arg7: memref<8x96xbf16, #tpu.memory_space<vmem>>) attributes {dimension_semantics = [#tpu.dimension_semantics<parallel>, #tpu.dimension_semantics<arbitrary>], iteration_bounds = array<i64: 2, 1>, scalar_prefetch = 0 : i64, scratch_operands = 1 : i64, tpu.core_type = #tpu.core_type<tc>, window_params = [{transform_indices = @transform_0, window_bounds = array<i64: 1, 8, 32>}, {pipeline_mode = #tpu.pipeline_mode<synchronous>, transform_indices = @transform_1, window_bounds = array<i64: 32, 96>}, {pipeline_mode = #tpu.pipeline_mode<synchronous>, transform_indices = @transform_2, window_bounds = array<i64: 4, 8, 32>}, {pipeline_mode = #tpu.pipeline_mode<synchronous>, transform_indices = @transform_3, window_bounds = array<i64: 1, 32>}, {transform_indices = @transform_4, window_bounds = array<i64: 1, 8, 32>}]} {
    %c0_i32 = arith.constant 0 : i32
    %0 = arith.cmpi eq, %arg1, %c0_i32 : i32
    %1 = arith.extui %0 : i1 to i32
    %c0_i32_0 = arith.constant 0 : i32
    %2 = arith.cmpi ne, %1, %c0_i32_0 : i32
    scf.if %2 {
      %c0_16 = arith.constant 0 : index
      %c0_17 = arith.constant 0 : index
      %c0_18 = arith.constant 0 : index
      %58 = vector.load %arg2[%c0_16, %c0_17, %c0_18] : memref<1x8x32xbf16, #tpu.memory_space<vmem>>, vector<1x8x32xbf16>
      %59 = vector.shape_cast %58 : vector<1x8x32xbf16> to vector<8x32xbf16>
      %c0_19 = arith.constant 0 : index
      %c0_20 = arith.constant 0 : index
      %60 = vector.load %arg3[%c0_19, %c0_20] : memref<32x96xbf16, #tpu.memory_space<vmem>>, vector<32x96xbf16>
      %cst_21 = arith.constant dense<0.000000e+00> : vector<8x96xf32>
      %61 = tpu.matmul %59, %60, %cst_21 {dimension_numbers = #tpu.dot_dimension_numbers<[1], [0], [0], [1], [0, 0, 1, 1], [], []>} : vector<8x32xbf16>, vector<32x96xbf16>, vector<8x96xf32> -> vector<8x96xf32>
      %62 = arith.truncf %61 : vector<8x96xf32> to vector<8x96xbf16>
      %c0_22 = arith.constant 0 : index
      %c0_23 = arith.constant 0 : index
      %63 = vector.load %arg7[%c0_22, %c0_23] : memref<8x96xbf16, #tpu.memory_space<vmem>>, vector<8x96xbf16>
      tpu.vector_store %arg7[%c0_22, %c0_23], %62 {strides = array<i32>} : memref<8x96xbf16, #tpu.memory_space<vmem>>, vector<8x96xbf16>,
    } else {
    }
    %c8_i32 = arith.constant 8 : i32
    %3 = arith.muli %arg1, %c8_i32 : i32
    %4 = tpu.assume_multiple %3, 8 : i32
    %5 = arith.index_cast %4 : i32 to index
    %c0 = arith.constant 0 : index
    %6 = vector.load %arg7[%5, %c0] : memref<8x96xbf16, #tpu.memory_space<vmem>>, vector<8x96xbf16>
    %c0_1 = arith.constant 0 : index
    %c0_2 = arith.constant 0 : index
    %7 = vector.load %arg7[%c0_1, %c0_2] : memref<8x96xbf16, #tpu.memory_space<vmem>>, vector<8x96xbf16>
    %8 = vector.extract_strided_slice %6 {offsets = [0, 0], sizes = [8, 8], strides = [1, 1]} : vector<8x96xbf16> to vector<8x8xbf16>
    %9 = vector.extract_strided_slice %6 {offsets = [0, 8], sizes = [8, 8], strides = [1, 1]} : vector<8x96xbf16> to vector<8x8xbf16>
    %10 = vector.extract_strided_slice %6 {offsets = [0, 16], sizes = [8, 8], strides = [1, 1]} : vector<8x96xbf16> to vector<8x8xbf16>
    %11 = vector.extract_strided_slice %6 {offsets = [0, 24], sizes = [8, 8], strides = [1, 1]} : vector<8x96xbf16> to vector<8x8xbf16>
    %12 = vector.shape_cast %8 : vector<8x8xbf16> to vector<1x8x8xbf16>
    %13 = vector.shape_cast %9 : vector<8x8xbf16> to vector<1x8x8xbf16>
    %14 = vector.shape_cast %10 : vector<8x8xbf16> to vector<1x8x8xbf16>
    %15 = vector.shape_cast %11 : vector<8x8xbf16> to vector<1x8x8xbf16>
    %16 = tpu.concatenate %12, %13, %14, %15 in 0 : vector<1x8x8xbf16>, vector<1x8x8xbf16>, vector<1x8x8xbf16>, vector<1x8x8xbf16> -> vector<4x8x8xbf16>
    %17 = vector.extract_strided_slice %7 {offsets = [0, 32], sizes = [8, 8], strides = [1, 1]} : vector<8x96xbf16> to vector<8x8xbf16>
    %18 = vector.extract_strided_slice %7 {offsets = [0, 40], sizes = [8, 8], strides = [1, 1]} : vector<8x96xbf16> to vector<8x8xbf16>
    %19 = vector.extract_strided_slice %7 {offsets = [0, 48], sizes = [8, 8], strides = [1, 1]} : vector<8x96xbf16> to vector<8x8xbf16>
    %20 = vector.extract_strided_slice %7 {offsets = [0, 56], sizes = [8, 8], strides = [1, 1]} : vector<8x96xbf16> to vector<8x8xbf16>
    %21 = vector.shape_cast %17 : vector<8x8xbf16> to vector<1x8x8xbf16>
    %22 = vector.shape_cast %18 : vector<8x8xbf16> to vector<1x8x8xbf16>
    %23 = vector.shape_cast %19 : vector<8x8xbf16> to vector<1x8x8xbf16>
    %24 = vector.shape_cast %20 : vector<8x8xbf16> to vector<1x8x8xbf16>
    %25 = tpu.concatenate %21, %22, %23, %24 in 0 : vector<1x8x8xbf16>, vector<1x8x8xbf16>, vector<1x8x8xbf16>, vector<1x8x8xbf16> -> vector<4x8x8xbf16>
    %26 = vector.extract_strided_slice %7 {offsets = [0, 64], sizes = [8, 8], strides = [1, 1]} : vector<8x96xbf16> to vector<8x8xbf16>
    %27 = vector.extract_strided_slice %7 {offsets = [0, 72], sizes = [8, 8], strides = [1, 1]} : vector<8x96xbf16> to vector<8x8xbf16>
    %28 = vector.extract_strided_slice %7 {offsets = [0, 80], sizes = [8, 8], strides = [1, 1]} : vector<8x96xbf16> to vector<8x8xbf16>
    %29 = vector.extract_strided_slice %7 {offsets = [0, 88], sizes = [8, 8], strides = [1, 1]} : vector<8x96xbf16> to vector<8x8xbf16>
    %30 = vector.shape_cast %26 : vector<8x8xbf16> to vector<1x8x8xbf16>
    %31 = vector.shape_cast %27 : vector<8x8xbf16> to vector<1x8x8xbf16>
    %32 = vector.shape_cast %28 : vector<8x8xbf16> to vector<1x8x8xbf16>
    %33 = vector.shape_cast %29 : vector<8x8xbf16> to vector<1x8x8xbf16>
    %34 = tpu.concatenate %30, %31, %32, %33 in 0 : vector<1x8x8xbf16>, vector<1x8x8xbf16>, vector<1x8x8xbf16>, vector<1x8x8xbf16> -> vector<4x8x8xbf16>
    "tpu.trace_start"() <{level = 10 : i32, message = "hqd,hkd->hqk"}> : () -> ()
    %cst = arith.constant dense<0.000000e+00> : vector<4x8x8xf32>
    %35 = tpu.matmul %16, %25, %cst {dimension_numbers = #tpu.dot_dimension_numbers<[2], [2], [1], [1], [0, 0, 0, 1, 1, 1], [0], [0]>} : vector<4x8x8xbf16>, vector<4x8x8xbf16>, vector<4x8x8xf32> -> vector<4x8x8xf32>
    "tpu.trace_stop"() : () -> ()
    %cst_3 = arith.constant dense<0xFF800000> : vector<4x8xf32>
    %36 = vector.multi_reduction <maximumf>, %35, %cst_3 [2] : vector<4x8x8xf32> to vector<4x8xf32>
    %37 = vector.shape_cast %36 : vector<4x8xf32> to vector<4x8x1xf32>
    %38 = vector.broadcast %37 : vector<4x8x1xf32> to vector<4x8x8xf32>
    %39 = arith.subf %35, %38 : vector<4x8x8xf32>
    %40 = math.exp %39 : vector<4x8x8xf32>
    %cst_4 = arith.constant dense<0.000000e+00> : vector<4x8xf32>
    %41 = vector.multi_reduction <add>, %40, %cst_4 [2] : vector<4x8x8xf32> to vector<4x8xf32>
    %42 = vector.shape_cast %41 : vector<4x8xf32> to vector<4x8x1xf32>
    %43 = tpu.reciprocal %42 {approx = true} : vector<4x8x1xf32> -> vector<4x8x1xf32>
    %44 = vector.broadcast %43 : vector<4x8x1xf32> to vector<4x8x8xf32>
    %45 = arith.mulf %40, %44 : vector<4x8x8xf32>
    %46 = arith.truncf %45 : vector<4x8x8xf32> to vector<4x8x8xbf16>
    "tpu.trace_start"() <{level = 10 : i32, message = "hqk,hkd->hqd"}> : () -> ()
    %cst_5 = arith.constant dense<0.000000e+00> : vector<4x8x8xf32>
    %47 = tpu.matmul %46, %34, %cst_5 {dimension_numbers = #tpu.dot_dimension_numbers<[2], [1], [1], [2], [0, 0, 0, 1, 1, 2], [0], [0]>} : vector<4x8x8xbf16>, vector<4x8x8xbf16>, vector<4x8x8xf32> -> vector<4x8x8xf32>
    "tpu.trace_stop"() : () -> ()
    %48 = arith.truncf %47 : vector<4x8x8xf32> to vector<4x8x8xbf16>
    %c0_6 = arith.constant 0 : index
    %c0_7 = arith.constant 0 : index
    %c0_8 = arith.constant 0 : index
    %49 = vector.load %arg4[%c0_6, %c0_7, %c0_8] : memref<4x8x32xbf16, #tpu.memory_space<vmem>>, vector<4x8x32xbf16>
    "tpu.trace_start"() <{level = 10 : i32, message = "hqd,hdc->hqc"}> : () -> ()
    %cst_9 = arith.constant dense<0.000000e+00> : vector<4x8x32xf32>
    %50 = tpu.matmul %48, %49, %cst_9 {dimension_numbers = #tpu.dot_dimension_numbers<[2], [1], [1], [2], [0, 0, 0, 1, 1, 2], [0], [0]>} : vector<4x8x8xbf16>, vector<4x8x32xbf16>, vector<4x8x32xf32> -> vector<4x8x32xf32>
    "tpu.trace_stop"() : () -> ()
    %cst_10 = arith.constant dense<0.000000e+00> : vector<8x32xf32>
    %51 = vector.multi_reduction <add>, %50, %cst_10 [0] : vector<4x8x32xf32> to vector<8x32xf32>
    %c0_11 = arith.constant 0 : index
    %c0_12 = arith.constant 0 : index
    %52 = vector.load %arg5[%c0_11, %c0_12] : memref<1x32xf32, #tpu.memory_space<vmem>>, vector<1x32xf32>
    %53 = vector.broadcast %52 : vector<1x32xf32> to vector<8x32xf32>
    %54 = arith.addf %51, %53 : vector<8x32xf32>
    %c0_13 = arith.constant 0 : index
    %c0_14 = arith.constant 0 : index
    %c0_15 = arith.constant 0 : index
    %55 = vector.load %arg6[%c0_13, %c0_14, %c0_15] : memref<1x8x32xf32, #tpu.memory_space<vmem>>, vector<1x8x32xf32>
    %56 = vector.shape_cast %55 : vector<1x8x32xf32> to vector<8x32xf32>
    %57 = vector.shape_cast %54 : vector<8x32xf32> to vector<1x8x32xf32>
    tpu.vector_store %arg6[%c0_13, %c0_14, %c0_15], %57 {strides = array<i32>} : memref<1x8x32xf32, #tpu.memory_space<vmem>>, vector<1x8x32xf32>,
    return
  }
  func.func @transform_0(%arg0: i32, %arg1: i32) -> (i32, i32, i32) {
    %c0_i32 = arith.constant 0 : i32
    %c0_i32_0 = arith.constant 0 : i32
    %c0_i32_1 = arith.constant 0 : i32
    return %arg0, %c0_i32, %c0_i32_0 : i32, i32, i32
  }
  func.func @transform_1(%arg0: i32, %arg1: i32) -> (i32, i32) {
    %c0_i32 = arith.constant 0 : i32
    %c0_i32_0 = arith.constant 0 : i32
    %c0_i32_1 = arith.constant 0 : i32
    return %c0_i32, %c0_i32_0 : i32, i32
  }
  func.func @transform_2(%arg0: i32, %arg1: i32) -> (i32, i32, i32) {
    %c0_i32 = arith.constant 0 : i32
    %c0_i32_0 = arith.constant 0 : i32
    %c0_i32_1 = arith.constant 0 : i32
    %c0_i32_2 = arith.constant 0 : i32
    return %c0_i32, %c0_i32_0, %c0_i32_1 : i32, i32, i32
  }
  func.func @transform_3(%arg0: i32, %arg1: i32) -> (i32, i32) {
    %c0_i32 = arith.constant 0 : i32
    %c0_i32_0 = arith.constant 0 : i32
    %c0_i32_1 = arith.constant 0 : i32
    return %c0_i32, %c0_i32_0 : i32, i32
  }
  func.func @transform_4(%arg0: i32, %arg1: i32) -> (i32, i32, i32) {
    %c0_i32 = arith.constant 0 : i32
    %c0_i32_0 = arith.constant 0 : i32
    return %arg0, %arg1, %c0_i32 : i32, i32, i32
  }
}

</mosaic_0001>

<llo_original>
// kernel: tpu_custom_call.1
$region0: #{tpu_custom_call.1}
  #allocation0 [shape = 'u32[]', space=smem, size = 0x4, offset = 0x4, fixed_abs, tag = 'smem constant byte address 0x4 - core index']
  #allocation1 [shape = 'u32[144,128]{1,0:T(1,128)}', space=vmem, size = 0x12000, scoped, tag = 'internal scratch']
  #allocation2 [shape = 'bf16[8,96]{1,0:T(8,128)(2,1)}', space=vmem, size = 0x800, scoped, tag = 'scratch operand']
  %s0 = inlined_call_operand.hbm [shape: bf16[2,8,32], index: 0, kind: input, shape index: {}]
  %s1 = inlined_call_operand.hbm [shape: bf16[32,96], index: 1, kind: input, shape index: {}]
  %s2 = inlined_call_operand.hbm [shape: bf16[4,8,32], index: 2, kind: input, shape index: {}]
  %s3 = inlined_call_operand.vmem [shape: f32[1,32], index: 3, kind: input, shape index: {}]
  %s4 = inlined_call_operand.hbm [shape: f32[2,8,32], index: 4, kind: output, shape index: {}]
  %s5 = sld [smem:[#allocation0]]
  $region65: #{tpu_custom_call.1} parent=0
    _
  %s7 = ssub.s32 1, %s5
  %s8 = scalar_select 0, %s7, %s5
  $region1: #{tpu_custom_call.1} parent=0
    #allocation3 [shape = 'u8[4096]{0}', space=vmem, size = 0x1000, scoped, tag = 'input window, operand 0']
    #allocation4 [shape = 's32[2]{0}', space=sflag, size = 0x8, scoped, tag = 'scoped memory for tpu_custom_call.1']
    #allocation5 [shape = 's32[2]{0}', space=sflag, size = 0x8, scoped, tag = 'scoped memory for tpu_custom_call.1']
    #allocation6 [shape = 'u8[8192]{0}', space=vmem, size = 0x2000, scoped, tag = 'input window, operand 1, single buffered']
    #allocation7 [shape = 's32[1]{0}', space=sflag, size = 0x4, scoped, tag = 'scoped memory for tpu_custom_call.1']
    #allocation8 [shape = 'u8[8192]{0}', space=vmem, size = 0x2000, scoped, tag = 'input window, operand 2, single buffered']
    #allocation9 [shape = 'u8[8192]{0}', space=vmem, size = 0x2000, scoped, tag = 'output window, operand 0']
    %9 = vsyncpa [#allocation4], 0
    %s10 = scalar_lea.sflag [#allocation4], 1
    %11 = vsyncpa %s10, 0
    %12 = vsyncpa [#allocation7], 0
    %13 = vsyncpa [#allocation5], 0
    %s14 = scalar_lea.sflag [#allocation5], 1
    %15 = vsyncpa %s14, 0
    loop: start=0, step=1, limit=4
    $region2: #{tpu_custom_call.1} parent=1 // loop_pre_header
      _
    $region3: #{tpu_custom_call.1} parent=1 // loop_header
      %s17 = sphi 0, %s21
      %p18 = scmp.ge.s32.totalorder %s17, 4
      %s24 = sphi 0, %s36
      %s25 = sphi 0, %s32
      %s26 = sphi 0, %s24
      %s27 = sphi 0, %s25
      %s28 = sphi 0, %s26
      %s29 = sphi 0, %s27
      %s39 = sphi 0, %s41
      %s42 = sphi 0, %s39
      %s43 = sphi 0, %s42
      %s59 = sphi 0, %s43
      %s63 = sphi 0, %s63
      %s65 = sphi 0, %s63
      %s66 = sphi 0, %s65
      %s80 = sphi 0, %s66
      %s84 = sphi 0, %s84
      %s86 = sphi 0, %s84
      %s87 = sphi 0, %s86
      %s101 = sphi 0, %s87
      %s105 = sphi 0, %s105
      %s107 = sphi 0, %s105
      %s108 = sphi 0, %s107
      %s122 = sphi 0, %s108
      %s130 = sphi 0, %s132
      %s133 = sphi 0, %s130
      %s134 = sphi 0, %s133
      %s150 = sphi 0, %s134
    $region4: #{tpu_custom_call.1} parent=1 // loop_header_branch
      %20 = sbr.rel (%p18) target = $region8
    $region5: #{tpu_custom_call.1} parent=1 // loop_body
      %s22 = ssub.s32 %s17, 1
      %s23 = ssub.s32 %s17, 2
      %s30 = sadd.s32 1, %s25
      %p31 = scmp.ge.s32.totalorder %s30, 1
      %s32 = scalar_select %p31, 0, %s30
      %s33 = sadd.s32 1, %s24
      %s34 = scalar_select %p31, %s33, %s24
      %p35 = scmp.ge.s32.totalorder %s34, 2
      %s36 = scalar_select %p35, 0, %s34
      %s37 = ssub.s32 %s24, %s36
      %p38 = scmp.eq.s32.totalorder %s37, 0
      %s40 = sadd.s32 %s39, 1
      %s41 = scalar_select %p38, %s39, %s40
      %p44 = pneg %p38
      %p45 = scmp.eq.s32.totalorder %s17, 1
      %p46 = por %p44, %p45
      %p47 = scmp.ne.s32.totalorder %s39, %s42
      %p48 = scmp.eq.s32.totalorder %s17, 0
      %p49 = por %p47, %p48
      %p50 = scmp.ne.s32.totalorder %s39, %s42
      %p51 = scmp.eq.s32.totalorder %s22, 1
      %p52 = por %p50, %p51
      %p53 = scmp.ne.s32.totalorder %s42, %s43
      %p54 = scmp.eq.s32.totalorder %s22, 0
      %p55 = por %p53, %p54
      %p56 = scmp.ne.s32.totalorder %s42, %s43
      %p57 = scmp.eq.s32.totalorder %s23, 1
      %p58 = por %p56, %p57
      %p60 = scmp.ne.s32.totalorder %s43, %s59
      %p61 = scmp.eq.s32.totalorder %s23, 0
      %p62 = por %p60, %p61
      %s64 = sadd.s32 %s63, 1
      %p67 = scmp.eq.s32.totalorder %s17, 1
      %p68 = scmp.ne.s32.totalorder %s63, %s65
      %p69 = scmp.eq.s32.totalorder %s17, 0
      %p70 = por %p68, %p69
      %p71 = scmp.ne.s32.totalorder %s63, %s65
      %p72 = scmp.eq.s32.totalorder %s22, 1
      %p73 = por %p71, %p72
      %p74 = scmp.ne.s32.totalorder %s65, %s66
      %p75 = scmp.eq.s32.totalorder %s22, 0
      %p76 = por %p74, %p75
      %p77 = scmp.ne.s32.totalorder %s65, %s66
      %p78 = scmp.eq.s32.totalorder %s23, 1
      %p79 = por %p77, %p78
      %p81 = scmp.ne.s32.totalorder %s66, %s80
      %p82 = scmp.eq.s32.totalorder %s23, 0
      %p83 = por %p81, %p82
      %s85 = sadd.s32 %s84, 1
      %p88 = scmp.eq.s32.totalorder %s17, 1
      %p89 = scmp.ne.s32.totalorder %s84, %s86
      %p90 = scmp.eq.s32.totalorder %s17, 0
      %p91 = por %p89, %p90
      %p92 = scmp.ne.s32.totalorder %s84, %s86
      %p93 = scmp.eq.s32.totalorder %s22, 1
      %p94 = por %p92, %p93
      %p95 = scmp.ne.s32.totalorder %s86, %s87
      %p96 = scmp.eq.s32.totalorder %s22, 0
      %p97 = por %p95, %p96
      %p98 = scmp.ne.s32.totalorder %s86, %s87
      %p99 = scmp.eq.s32.totalorder %s23, 1
      %p100 = por %p98, %p99
      %p102 = scmp.ne.s32.totalorder %s87, %s101
      %p103 = scmp.eq.s32.totalorder %s23, 0
      %p104 = por %p102, %p103
      %s106 = sadd.s32 %s105, 1
      %p109 = scmp.eq.s32.totalorder %s17, 1
      %p110 = scmp.ne.s32.totalorder %s105, %s107
      %p111 = scmp.eq.s32.totalorder %s17, 0
      %p112 = por %p110, %p111
      %p113 = scmp.ne.s32.totalorder %s105, %s107
      %p114 = scmp.eq.s32.totalorder %s22, 1
      %p115 = por %p113, %p114
      %p116 = scmp.ne.s32.totalorder %s107, %s108
      %p117 = scmp.eq.s32.totalorder %s22, 0
      %p118 = por %p116, %p117
      %p119 = scmp.ne.s32.totalorder %s107, %s108
      %p120 = scmp.eq.s32.totalorder %s23, 1
      %p121 = por %p119, %p120
      %p123 = scmp.ne.s32.totalorder %s108, %s122
      %p124 = scmp.eq.s32.totalorder %s23, 0
      %p125 = por %p123, %p124
      %s126 = ssub.s32 %s24, %s36
      %s127 = ssub.s32 %s25, %s32
      %s128 = sor.u32 %s126, %s127
      %p129 = scmp.eq.s32.totalorder %s128, 0
      %s131 = sadd.s32 %s130, 1
      %s132 = scalar_select %p129, %s130, %s131
      %p135 = pneg %p129
      %p136 = scmp.eq.s32.totalorder %s17, 1
      %p137 = por %p135, %p136
      %p138 = scmp.ne.s32.totalorder %s130, %s133
      %p139 = scmp.eq.s32.totalorder %s17, 0
      %p140 = por %p138, %p139
      %p141 = scmp.ne.s32.totalorder %s130, %s133
      %p142 = scmp.eq.s32.totalorder %s22, 1
      %p143 = por %p141, %p142
      %p144 = scmp.ne.s32.totalorder %s133, %s134
      %p145 = scmp.eq.s32.totalorder %s22, 0
      %p146 = por %p144, %p145
      %p147 = scmp.ne.s32.totalorder %s133, %s134
      %p148 = scmp.eq.s32.totalorder %s23, 1
      %p149 = por %p147, %p148
      %p151 = scmp.ne.s32.totalorder %s134, %s150
      %p152 = scmp.eq.s32.totalorder %s23, 0
      %p153 = por %p151, %p152
      %p154 = scmp.le.s32.totalorder 1, %s17
      %p155 = scmp.lt.s32.totalorder %s17, 3
      %p156 = pnand %p154, %p155
      %p157 = pneg %p156
      // Predicated region
      $region9: #{tpu_custom_call.1} parent=5 // pred_check
        _
      $region10: #{tpu_custom_call.1} parent=5 // pred_check_branch
        %159 = sbr.rel (%p156) target = $region12
      $region11: #{tpu_custom_call.1} parent=5 // pred_region
        %s160 = ssub.s32 %s17, 1
        // Predicated region
        $region13: #{tpu_custom_call.1} parent=11 // pred_check
          %p161 = pneg %p76
        $region14: #{tpu_custom_call.1} parent=11 // pred_check_branch
          %163 = sbr.rel (%p161) target = $region16
        $region15: #{tpu_custom_call.1} parent=11 // pred_region
          %s165 = ssub.s32 256, 256
          %166 = vsyncadd [#allocation7], %s165
          %s167 = sshll.u32 [#allocation6], 4
          %s168 = int_to_ptr.vmem [resolvable:$true] %s167
          %173 = dma.hbm_to_vmem [thread:$0]  %s1, 256, %s168, [#allocation7], 64, 64, 4
        $region16: #{tpu_custom_call.1} parent=11 // pred_fallthru
          _
        // Predicated region
        $region17: #{tpu_custom_call.1} parent=11 // pred_check
          %p174 = pneg %p97
        $region18: #{tpu_custom_call.1} parent=11 // pred_check_branch
          %176 = sbr.rel (%p174) target = $region20
        $region19: #{tpu_custom_call.1} parent=11 // pred_region
          %s178 = ssub.s32 256, 256
          %179 = vsyncadd [#allocation7], %s178
          %s180 = sshll.u32 [#allocation8], 4
          %s181 = int_to_ptr.vmem [resolvable:$true] %s180
          %186 = dma.hbm_to_vmem [thread:$0]  %s2, 256, %s181, [#allocation7], 64, 64, 4
        $region20: #{tpu_custom_call.1} parent=11 // pred_fallthru
          _
        // Predicated region
        $region21: #{tpu_custom_call.1} parent=11 // pred_check
          %p187 = pneg %p118
        $region22: #{tpu_custom_call.1} parent=11 // pred_check_branch
          %189 = sbr.rel (%p187) target = $region24
        $region23: #{tpu_custom_call.1} parent=11 // pred_region
          _
        $region24: #{tpu_custom_call.1} parent=11 // pred_fallthru
          _
      $region12: #{tpu_custom_call.1} parent=5 // pred_fallthru
        _
      %p190 = scmp.lt.s32.totalorder %s17, 2
      // Predicated region
      $region25: #{tpu_custom_call.1} parent=5 // pred_check
        %p191 = pneg %p190
      $region26: #{tpu_custom_call.1} parent=5 // pred_check_branch
        %193 = sbr.rel (%p191) target = $region28
      $region27: #{tpu_custom_call.1} parent=5 // pred_region
        // Predicated region
        $region29: #{tpu_custom_call.1} parent=27 // pred_check
          %p194 = pneg %p49
        $region30: #{tpu_custom_call.1} parent=27 // pred_check_branch
          %196 = sbr.rel (%p194) target = $region32
        $region31: #{tpu_custom_call.1} parent=27 // pred_region
          %s197 = sand.u32 %s39, 1
          %s198 = scalar_lea.sflag [#allocation4], %s197
          %s199 = sand.u32 %s39, 1
          %s200 = smul.addr %s199, 4
          %s201 = scalar_lea.vmem [#allocation3], %s200
          %s203 = ssub.s32 64, 64
          %204 = vsyncadd %s198, %s203
          %s205 = smul.addr %s24, 64
          %s206 = scalar_lea.hbm %s0, %s205
          %s208 = sshll.u32 %s201, 4
          %s209 = int_to_ptr.vmem [resolvable:$true] %s208
          %211 = dma.hbm_to_vmem [thread:$0]  %s206, 64, %s209, %s198
        $region32: #{tpu_custom_call.1} parent=27 // pred_fallthru
          _
      $region28: #{tpu_custom_call.1} parent=5 // pred_fallthru
        _
      %p212 = scmp.le.s32.totalorder 1, %s17
      %p213 = scmp.lt.s32.totalorder %s17, 3
      %p214 = pnand %p212, %p213
      %p215 = pneg %p214
      // Predicated region
      $region33: #{tpu_custom_call.1} parent=5 // pred_check
        _
      $region34: #{tpu_custom_call.1} parent=5 // pred_check_branch
        %217 = sbr.rel (%p214) target = $region36
      $region35: #{tpu_custom_call.1} parent=5 // pred_region
        %s218 = ssub.s32 %s17, 1
        %s219 = sand.u32 %s42, 1
        %s220 = scalar_lea.sflag [#allocation4], %s219
        %s221 = sand.u32 %s42, 1
        %s222 = smul.addr %s221, 4
        %s223 = scalar_lea.vmem [#allocation3], %s222
        // Predicated region
        $region37: #{tpu_custom_call.1} parent=35 // pred_check
          %p224 = pneg %p55
        $region38: #{tpu_custom_call.1} parent=35 // pred_check_branch
          %226 = sbr.rel (%p224) target = $region40
        $region39: #{tpu_custom_call.1} parent=35 // pred_region
          %227 = dma.done %s220, 64
        $region40: #{tpu_custom_call.1} parent=35 // pred_fallthru
          _
        // Predicated region
        $region41: #{tpu_custom_call.1} parent=35 // pred_check
          %p228 = pneg %p76
        $region42: #{tpu_custom_call.1} parent=35 // pred_check_branch
          %230 = sbr.rel (%p228) target = $region44
        $region43: #{tpu_custom_call.1} parent=35 // pred_region
          %231 = dma.done [#allocation7], 256
        $region44: #{tpu_custom_call.1} parent=35 // pred_fallthru
          _
        // Predicated region
        $region45: #{tpu_custom_call.1} parent=35 // pred_check
          %p232 = pneg %p97
        $region46: #{tpu_custom_call.1} parent=35 // pred_check_branch
          %234 = sbr.rel (%p232) target = $region48
        $region47: #{tpu_custom_call.1} parent=35 // pred_region
          %235 = dma.done [#allocation7], 256
        $region48: #{tpu_custom_call.1} parent=35 // pred_fallthru
          _
        %s236 = sand.u32 %s42, 1
        %s237 = scalar_lea.sflag [#allocation4], %s236
        %s238 = sand.u32 %s42, 1
        %s239 = smul.addr %s238, 4
        %s240 = scalar_lea.vmem [#allocation3], %s239
        %p241 = pneg %p55
        %p242 = pneg %p52
        %p243 = pneg %p76
        %p244 = pneg %p73
        %p245 = pneg %p97
        %p246 = pneg %p94
        %p247 = pneg %p118
        %p248 = pneg %p115
        %p249 = pneg %p146
        %p250 = pneg %p143
        %s251 = sand.u32 %s133, 1
        %s252 = scalar_lea.sflag [#allocation5], %s251
        %s253 = sand.u32 %s133, 1
        %s254 = smul.addr %s253, 8
        %s255 = scalar_lea.vmem [#allocation9], %s254
        %p257 = scmp.eq.s32.totalorder %s27, 0
        // Predicated region
        $region49: #{tpu_custom_call.1} parent=35 // pred_check
          %p258 = pneg %p257
        $region50: #{tpu_custom_call.1} parent=35 // pred_check_branch
          %260 = sbr.rel (%p258) target = $region52
        $region51: #{tpu_custom_call.1} parent=35 // pred_region
          %v261 = vld [vmem:[%s223] sm:$0xf]
          %v262 = vld [vmem:[#allocation6] sm:$0xf]
          %v263 = vld [vmem:[#allocation6 + $0x4] sm:$0xf]
          %v264 = vld [vmem:[#allocation6 + $0x8] sm:$0xf]
          %v265 = vld [vmem:[#allocation6 + $0xc] sm:$0xf]
          %v270 = vunpack.c.l.b16 %v262
          %v271 = vunpack.c.l.b16 %v263
          %v272 = vunpack.c.l.b16 %v264
          %v273 = vunpack.c.l.b16 %v265
          %v274 = vpack.c.b16 %v271, %v270
          %v275 = vpack.c.b16 %v273, %v272
          %vm278 = vcmask 261120
          %v280 = vsel %vm278, %v261, 0
          %282 = vmatprep.subr.bf16.mxu0 0
          %283 = vmatpush1.bf16.msra.mxu0 0
          %284 = vmatprep.subr.bf16.mxu0 0
          %285 = vmatpush1.bf16.msra.mxu0 0
          %286 = vmatprep.subr.bf16.mxu0 0
          %287 = vmatpush1.bf16.msra.mxu0 0
          %288 = vmatprep.subr.bf16.mxu0 0
          %289 = vmatpush1.bf16.msra.mxu0 0
          %290 = vmatprep.subr.bf16.mxu0 0
          %291 = vmatpush1.bf16.msra.mxu0 0
          %292 = vmatprep.subr.bf16.mxu0 0
          %293 = vmatpush1.bf16.msra.mxu0 0
          %294 = vmatprep.subr.bf16.mxu0 0
          %295 = vmatpush1.bf16.msra.mxu0 %v275
          %296 = vmatprep.subr.bf16.mxu0 0
          %297 = vmatpush1.bf16.msra.mxu0 %v274
          %298 = vmatprep.subr.bf16.mxu0 0
          %299 = vmatpush2.bf16.msra.mxu0 0
          %300 = vmatprep.subr.bf16.mxu0 0
          %301 = vmatpush2.bf16.msra.mxu0 0
          %302 = vmatprep.subr.bf16.mxu0 0
          %303 = vmatpush2.bf16.msra.mxu0 0
          %304 = vmatprep.subr.bf16.mxu0 0
          %305 = vmatpush2.bf16.msra.mxu0 0
          %306 = vmatprep.subr.bf16.mxu0 0
          %307 = vmatpush2.bf16.msra.mxu0 0
          %308 = vmatprep.subr.bf16.mxu0 0
          %309 = vmatpush2.bf16.msra.mxu0 0
          %310 = vmatprep.subr.bf16.mxu0 0
          %311 = vmatpush2.bf16.msra.mxu0 0
          %312 = vmatprep.subr.bf16.mxu0 0
          %313 = vmatpush2.bf16.msra.mxu0 0
          %314 = vmatprep.mubr.bf16.mxu0 0
          %315 = vmatmul.mubr.bf16.gmra.mxu0 %v280
          %v316 = vpop.f32.mrf.mxu0
          %v317 = vadd.f32 0.0, %v316
          %v318 = vpop.f32.mrf.mxu0
          %v319 = vpop.f32.mrf.mxu0
          %v320 = vpop.f32.mrf.mxu0
          %321 = vdwg.mxu0
          %v322 = vpack.c.bf16 %v317, %v317
          %vm323 = vcmask 781312
          %324 = vst.msk [vmem:[#allocation2] sm:$0xf] %vm323, %v322
        $region52: #{tpu_custom_call.1} parent=35 // pred_fallthru
          _
        %s325 = smul.u32 %s27, 8
        %s326 = sshra.s32 %s325, 3
        %s327 = sand.u32 %s325, 7
        %s328 = smul.addr %s326, 4
        %s329 = scalar_lea.vmem [#allocation2], %s328
        %v330 = vld [vmem:[%s329] sm:$0xf]
        %v331 = vld [vmem:[#allocation2] sm:$0xf]
        %333 = vrot.lane.b32.xlu0 %v330, 120
        %v334 = vpop.permute.xlu0 %333
        %335 = vrot.lane.b32.xlu0 %v330, 112
        %v336 = vpop.permute.xlu0 %335
        %337 = vrot.lane.b32.xlu0 %v330, 104
        %v338 = vpop.permute.xlu0 %337
        %340 = vrot.lane.b32.xlu0 %v331, 120
        %v341 = vpop.permute.xlu0 %340
        %342 = vrot.lane.b32.xlu0 %v331, 112
        %v343 = vpop.permute.xlu0 %342
        %344 = vrot.lane.b32.xlu0 %v331, 104
        %v345 = vpop.permute.xlu0 %344
        %v346 = vunpack.c.l.b16 %v331
        %v347 = vpack.c.b16 %v346, %v346
        %348 = vrot.lane.b32.xlu0 %v347, 96
        %v349 = vpop.permute.xlu0 %348
        %vm350 = vcmask 64512
        %v352 = vsel %vm350, %v330, 0
        %v355 = vsel %vm350, %v349, 0
        %357 = vmatprep.subr.bf16.mxu0 0
        %358 = vmatpush1.bf16.xpose.msra.mxu0 0
        %359 = vmatprep.subr.bf16.mxu0 0
        %360 = vmatpush1.bf16.xpose.msra.mxu0 0
        %361 = vmatprep.subr.bf16.mxu0 0
        %362 = vmatpush1.bf16.xpose.msra.mxu0 0
        %363 = vmatprep.subr.bf16.mxu0 0
        %364 = vmatpush1.bf16.xpose.msra.mxu0 0
        %365 = vmatprep.subr.bf16.mxu0 0
        %366 = vmatpush1.bf16.xpose.msra.mxu0 0
        %367 = vmatprep.subr.bf16.mxu0 0
        %368 = vmatpush1.bf16.xpose.msra.mxu0 0
        %369 = vmatprep.subr.bf16.mxu0 0
        %370 = vmatpush1.bf16.xpose.msra.mxu0 0
        %371 = vmatprep.subr.bf16.mxu0 0
        %372 = vmatpush1.bf16.xpose.msra.mxu0 %v355
        %373 = vmatprep.subr.bf16.mxu0 0
        %374 = vmatpush2.bf16.xpose.msra.mxu0 0
        %375 = vmatprep.subr.bf16.mxu0 0
        %376 = vmatpush2.bf16.xpose.msra.mxu0 0
        %377 = vmatprep.subr.bf16.mxu0 0
        %378 = vmatpush2.bf16.xpose.msra.mxu0 0
        %379 = vmatprep.subr.bf16.mxu0 0
        %380 = vmatpush2.bf16.xpose.msra.mxu0 0
        %381 = vmatprep.subr.bf16.mxu0 0
        %382 = vmatpush2.bf16.xpose.msra.mxu0 0
        %383 = vmatprep.subr.bf16.mxu0 0
        %384 = vmatpush2.bf16.xpose.msra.mxu0 0
        %385 = vmatprep.subr.bf16.mxu0 0
        %386 = vmatpush2.bf16.xpose.msra.mxu0 0
        %387 = vmatprep.subr.bf16.mxu0 0
        %388 = vmatpush2.bf16.xpose.msra.mxu0 0
        %389 = vmatprep.mubr.bf16.mxu0 0
        %390 = vmatmul.mubr.bf16.gmra.mxu0 %v352
        %v391 = vpop.f32.mrf.mxu0
        %v392 = vadd.f32 0.0, %v391
        %v393 = vpop.f32.mrf.mxu0
        %v394 = vpop.f32.mrf.mxu0
        %v395 = vpop.f32.mrf.mxu0
        %396 = vdwg.mxu0
        %v397 = vunpack.c.l.b16 %v341
        %v398 = vpack.c.b16 %v397, %v397
        %399 = vrot.lane.b32.xlu0 %v398, 96
        %v400 = vpop.permute.xlu0 %399
        %v402 = vsel %vm350, %v334, 0
        %v405 = vsel %vm350, %v400, 0
        %407 = vmatprep.subr.bf16.mxu0 0
        %408 = vmatpush1.bf16.xpose.msra.mxu0 0
        %409 = vmatprep.subr.bf16.mxu0 0
        %410 = vmatpush1.bf16.xpose.msra.mxu0 0
        %411 = vmatprep.subr.bf16.mxu0 0
        %412 = vmatpush1.bf16.xpose.msra.mxu0 0
        %413 = vmatprep.subr.bf16.mxu0 0
        %414 = vmatpush1.bf16.xpose.msra.mxu0 0
        %415 = vmatprep.subr.bf16.mxu0 0
        %416 = vmatpush1.bf16.xpose.msra.mxu0 0
        %417 = vmatprep.subr.bf16.mxu0 0
        %418 = vmatpush1.bf16.xpose.msra.mxu0 0
        %419 = vmatprep.subr.bf16.mxu0 0
        %420 = vmatpush1.bf16.xpose.msra.mxu0 0
        %421 = vmatprep.subr.bf16.mxu0 0
        %422 = vmatpush1.bf16.xpose.msra.mxu0 %v405
        %423 = vmatprep.subr.bf16.mxu0 0
        %424 = vmatpush2.bf16.xpose.msra.mxu0 0
        %425 = vmatprep.subr.bf16.mxu0 0
        %426 = vmatpush2.bf16.xpose.msra.mxu0 0
        %427 = vmatprep.subr.bf16.mxu0 0
        %428 = vmatpush2.bf16.xpose.msra.mxu0 0
        %429 = vmatprep.subr.bf16.mxu0 0
        %430 = vmatpush2.bf16.xpose.msra.mxu0 0
        %431 = vmatprep.subr.bf16.mxu0 0
        %432 = vmatpush2.bf16.xpose.msra.mxu0 0
        %433 = vmatprep.subr.bf16.mxu0 0
        %434 = vmatpush2.bf16.xpose.msra.mxu0 0
        %435 = vmatprep.subr.bf16.mxu0 0
        %436 = vmatpush2.bf16.xpose.msra.mxu0 0
        %437 = vmatprep.subr.bf16.mxu0 0
        %438 = vmatpush2.bf16.xpose.msra.mxu0 0
        %439 = vmatprep.mubr.bf16.mxu0 0
        %440 = vmatmul.mubr.bf16.gmra.mxu0 %v402
        %v441 = vpop.f32.mrf.mxu0
        %v442 = vadd.f32 0.0, %v441
        %v443 = vpop.f32.mrf.mxu0
        %v444 = vpop.f32.mrf.mxu0
        %v445 = vpop.f32.mrf.mxu0
        %446 = vdwg.mxu0
        %v447 = vunpack.c.l.b16 %v343
        %v448 = vpack.c.b16 %v447, %v447
        %449 = vrot.lane.b32.xlu0 %v448, 96
        %v450 = vpop.permute.xlu0 %449
        %v452 = vsel %vm350, %v336, 0
        %v455 = vsel %vm350, %v450, 0
        %457 = vmatprep.subr.bf16.mxu0 0
        %458 = vmatpush1.bf16.xpose.msra.mxu0 0
        %459 = vmatprep.subr.bf16.mxu0 0
        %460 = vmatpush1.bf16.xpose.msra.mxu0 0
        %461 = vmatprep.subr.bf16.mxu0 0
        %462 = vmatpush1.bf16.xpose.msra.mxu0 0
        %463 = vmatprep.subr.bf16.mxu0 0
        %464 = vmatpush1.bf16.xpose.msra.mxu0 0
        %465 = vmatprep.subr.bf16.mxu0 0
        %466 = vmatpush1.bf16.xpose.msra.mxu0 0
        %467 = vmatprep.subr.bf16.mxu0 0
        %468 = vmatpush1.bf16.xpose.msra.mxu0 0
        %469 = vmatprep.subr.bf16.mxu0 0
        %470 = vmatpush1.bf16.xpose.msra.mxu0 0
        %471 = vmatprep.subr.bf16.mxu0 0
        %472 = vmatpush1.bf16.xpose.msra.mxu0 %v455
        %473 = vmatprep.subr.bf16.mxu0 0
        %474 = vmatpush2.bf16.xpose.msra.mxu0 0
        %475 = vmatprep.subr.bf16.mxu0 0
        %476 = vmatpush2.bf16.xpose.msra.mxu0 0
        %477 = vmatprep.subr.bf16.mxu0 0
        %478 = vmatpush2.bf16.xpose.msra.mxu0 0
        %479 = vmatprep.subr.bf16.mxu0 0
        %480 = vmatpush2.bf16.xpose.msra.mxu0 0
        %481 = vmatprep.subr.bf16.mxu0 0
        %482 = vmatpush2.bf16.xpose.msra.mxu0 0
        %483 = vmatprep.subr.bf16.mxu0 0
        %484 = vmatpush2.bf16.xpose.msra.mxu0 0
        %485 = vmatprep.subr.bf16.mxu0 0
        %486 = vmatpush2.bf16.xpose.msra.mxu0 0
        %487 = vmatprep.subr.bf16.mxu0 0
        %488 = vmatpush2.bf16.xpose.msra.mxu0 0
        %489 = vmatprep.mubr.bf16.mxu0 0
        %490 = vmatmul.mubr.bf16.gmra.mxu0 %v452
        %v491 = vpop.f32.mrf.mxu0
        %v492 = vadd.f32 0.0, %v491
        %v493 = vpop.f32.mrf.mxu0
        %v494 = vpop.f32.mrf.mxu0
        %v495 = vpop.f32.mrf.mxu0
        %496 = vdwg.mxu0
        %v497 = vunpack.c.l.b16 %v345
        %v498 = vpack.c.b16 %v497, %v497
        %499 = vrot.lane.b32.xlu0 %v498, 96
        %v500 = vpop.permute.xlu0 %499
        %v502 = vsel %vm350, %v338, 0
        %v505 = vsel %vm350, %v500, 0
        %507 = vmatprep.subr.bf16.mxu0 0
        %508 = vmatpush1.bf16.xpose.msra.mxu0 0
        %509 = vmatprep.subr.bf16.mxu0 0
        %510 = vmatpush1.bf16.xpose.msra.mxu0 0
        %511 = vmatprep.subr.bf16.mxu0 0
        %512 = vmatpush1.bf16.xpose.msra.mxu0 0
        %513 = vmatprep.subr.bf16.mxu0 0
        %514 = vmatpush1.bf16.xpose.msra.mxu0 0
        %515 = vmatprep.subr.bf16.mxu0 0
        %516 = vmatpush1.bf16.xpose.msra.mxu0 0
        %517 = vmatprep.subr.bf16.mxu0 0
        %518 = vmatpush1.bf16.xpose.msra.mxu0 0
        %519 = vmatprep.subr.bf16.mxu0 0
        %520 = vmatpush1.bf16.xpose.msra.mxu0 0
        %521 = vmatprep.subr.bf16.mxu0 0
        %522 = vmatpush1.bf16.xpose.msra.mxu0 %v505
        %523 = vmatprep.subr.bf16.mxu0 0
        %524 = vmatpush2.bf16.xpose.msra.mxu0 0
        %525 = vmatprep.subr.bf16.mxu0 0
        %526 = vmatpush2.bf16.xpose.msra.mxu0 0
        %527 = vmatprep.subr.bf16.mxu0 0
        %528 = vmatpush2.bf16.xpose.msra.mxu0 0
        %529 = vmatprep.subr.bf16.mxu0 0
        %530 = vmatpush2.bf16.xpose.msra.mxu0 0
        %531 = vmatprep.subr.bf16.mxu0 0
        %532 = vmatpush2.bf16.xpose.msra.mxu0 0
        %533 = vmatprep.subr.bf16.mxu0 0
        %534 = vmatpush2.bf16.xpose.msra.mxu0 0
        %535 = vmatprep.subr.bf16.mxu0 0
        %536 = vmatpush2.bf16.xpose.msra.mxu0 0
        %537 = vmatprep.subr.bf16.mxu0 0
        %538 = vmatpush2.bf16.xpose.msra.mxu0 0
        %539 = vmatprep.mubr.bf16.mxu0 0
        %540 = vmatmul.mubr.bf16.gmra.mxu0 %v502
        %v541 = vpop.f32.mrf.mxu0
        %v542 = vadd.f32 0.0, %v541
        %v543 = vpop.f32.mrf.mxu0
        %v544 = vpop.f32.mrf.mxu0
        %v545 = vpop.f32.mrf.mxu0
        %546 = vdwg.mxu0
        %v547 = vsel %vm350, %v392, -inf
        %548 = vmax.xlane.f32.xlu0 %v547
        %v549 = vpop.xlane.xlu0 %548
        %v550 = vsel %vm350, %v442, -inf
        %551 = vmax.xlane.f32.xlu0 %v550
        %v552 = vpop.xlane.xlu0 %551
        %v553 = vsel %vm350, %v492, -inf
        %554 = vmax.xlane.f32.xlu0 %v553
        %v555 = vpop.xlane.xlu0 %554
        %v556 = vsel %vm350, %v542, -inf
        %557 = vmax.xlane.f32.xlu0 %v556
        %v558 = vpop.xlane.xlu0 %557
        %v559 = vsub.f32 %v392, %v549
        %v560 = vsub.f32 %v442, %v552
        %v561 = vsub.f32 %v492, %v555
        %v562 = vsub.f32 %v542, %v558
        %v563 = vmul.f32 %v559, 1.442695
        %v564 = vpow.pop %v563
        %v565 = vmul.f32 %v560, 1.442695
        %v566 = vpow.pop %v565
        %v567 = vmul.f32 %v561, 1.442695
        %v568 = vpow.pop %v567
        %v569 = vmul.f32 %v562, 1.442695
        %v570 = vpow.pop %v569
        %v571 = vsel %vm350, %v564, 0.0
        %572 = vadd.xlane.f32.xlu0 %v571
        %v573 = vpop.xlane.xlu0 %572
        %v574 = vsel %vm350, %v566, 0.0
        %575 = vadd.xlane.f32.xlu0 %v574
        %v576 = vpop.xlane.xlu0 %575
        %v577 = vsel %vm350, %v568, 0.0
        %578 = vadd.xlane.f32.xlu0 %v577
        %v579 = vpop.xlane.xlu0 %578
        %v580 = vsel %vm350, %v570, 0.0
        %581 = vadd.xlane.f32.xlu0 %v580
        %v582 = vpop.xlane.xlu0 %581
        %v583 = vrcp.pop %v573
        %v584 = vrcp.pop %v576
        %v585 = vrcp.pop %v579
        %v586 = vrcp.pop %v582
        %v587 = vmul.f32 %v564, %v583
        %v588 = vmul.f32 %v566, %v584
        %v589 = vmul.f32 %v568, %v585
        %v590 = vmul.f32 %v570, %v586
        %v591 = vpack.c.bf16 %v587, %v587
        %v592 = vpack.c.bf16 %v588, %v588
        %v593 = vpack.c.bf16 %v589, %v589
        %v594 = vpack.c.bf16 %v590, %v590
        %595 = vrot.lane.b32.xlu0 %v347, 64
        %v596 = vpop.permute.xlu0 %595
        %v598 = vsel %vm350, %v591, 0
        %vm600 = vcmask 1043456
        %v602 = vsel %vm600, %v596, 0
        %604 = vmatprep.subr.bf16.mxu0 0
        %605 = vmatpush1.bf16.msra.mxu0 0
        %606 = vmatprep.subr.bf16.mxu0 0
        %607 = vmatpush1.bf16.msra.mxu0 0
        %608 = vmatprep.subr.bf16.mxu0 0
        %609 = vmatpush1.bf16.msra.mxu0 0
        %610 = vmatprep.subr.bf16.mxu0 0
        %611 = vmatpush1.bf16.msra.mxu0 0
        %612 = vmatprep.subr.bf16.mxu0 0
        %613 = vmatpush1.bf16.msra.mxu0 0
        %614 = vmatprep.subr.bf16.mxu0 0
        %615 = vmatpush1.bf16.msra.mxu0 0
        %616 = vmatprep.subr.bf16.mxu0 0
        %617 = vmatpush1.bf16.msra.mxu0 0
        %618 = vmatprep.subr.bf16.mxu0 0
        %619 = vmatpush1.bf16.msra.mxu0 %v602
        %620 = vmatprep.subr.bf16.mxu0 0
        %621 = vmatpush2.bf16.msra.mxu0 0
        %622 = vmatprep.subr.bf16.mxu0 0
        %623 = vmatpush2.bf16.msra.mxu0 0
        %624 = vmatprep.subr.bf16.mxu0 0
        %625 = vmatpush2.bf16.msra.mxu0 0
        %626 = vmatprep.subr.bf16.mxu0 0
        %627 = vmatpush2.bf16.msra.mxu0 0
        %628 = vmatprep.subr.bf16.mxu0 0
        %629 = vmatpush2.bf16.msra.mxu0 0
        %630 = vmatprep.subr.bf16.mxu0 0
        %631 = vmatpush2.bf16.msra.mxu0 0
        %632 = vmatprep.subr.bf16.mxu0 0
        %633 = vmatpush2.bf16.msra.mxu0 0
        %634 = vmatprep.subr.bf16.mxu0 0
        %635 = vmatpush2.bf16.msra.mxu0 0
        %636 = vmatprep.mubr.bf16.mxu0 0
        %637 = vmatmul.mubr.bf16.gmra.mxu0 %v598
        %v638 = vpop.f32.mrf.mxu0
        %v639 = vadd.f32 0.0, %v638
        %v640 = vpop.f32.mrf.mxu0
        %v641 = vpop.f32.mrf.mxu0
        %v642 = vpop.f32.mrf.mxu0
        %643 = vdwg.mxu0
        %644 = vrot.lane.b32.xlu0 %v398, 64
        %v645 = vpop.permute.xlu0 %644
        %v647 = vsel %vm350, %v592, 0
        %v650 = vsel %vm600, %v645, 0
        %652 = vmatprep.subr.bf16.mxu0 0
        %653 = vmatpush1.bf16.msra.mxu0 0
        %654 = vmatprep.subr.bf16.mxu0 0
        %655 = vmatpush1.bf16.msra.mxu0 0
        %656 = vmatprep.subr.bf16.mxu0 0
        %657 = vmatpush1.bf16.msra.mxu0 0
        %658 = vmatprep.subr.bf16.mxu0 0
        %659 = vmatpush1.bf16.msra.mxu0 0
        %660 = vmatprep.subr.bf16.mxu0 0
        %661 = vmatpush1.bf16.msra.mxu0 0
        %662 = vmatprep.subr.bf16.mxu0 0
        %663 = vmatpush1.bf16.msra.mxu0 0
        %664 = vmatprep.subr.bf16.mxu0 0
        %665 = vmatpush1.bf16.msra.mxu0 0
        %666 = vmatprep.subr.bf16.mxu0 0
        %667 = vmatpush1.bf16.msra.mxu0 %v650
        %668 = vmatprep.subr.bf16.mxu0 0
        %669 = vmatpush2.bf16.msra.mxu0 0
        %670 = vmatprep.subr.bf16.mxu0 0
        %671 = vmatpush2.bf16.msra.mxu0 0
        %672 = vmatprep.subr.bf16.mxu0 0
        %673 = vmatpush2.bf16.msra.mxu0 0
        %674 = vmatprep.subr.bf16.mxu0 0
        %675 = vmatpush2.bf16.msra.mxu0 0
        %676 = vmatprep.subr.bf16.mxu0 0
        %677 = vmatpush2.bf16.msra.mxu0 0
        %678 = vmatprep.subr.bf16.mxu0 0
        %679 = vmatpush2.bf16.msra.mxu0 0
        %680 = vmatprep.subr.bf16.mxu0 0
        %681 = vmatpush2.bf16.msra.mxu0 0
        %682 = vmatprep.subr.bf16.mxu0 0
        %683 = vmatpush2.bf16.msra.mxu0 0
        %684 = vmatprep.mubr.bf16.mxu0 0
        %685 = vmatmul.mubr.bf16.gmra.mxu0 %v647
        %v686 = vpop.f32.mrf.mxu0
        %v687 = vadd.f32 0.0, %v686
        %v688 = vpop.f32.mrf.mxu0
        %v689 = vpop.f32.mrf.mxu0
        %v690 = vpop.f32.mrf.mxu0
        %691 = vdwg.mxu0
        %692 = vrot.lane.b32.xlu0 %v448, 64
        %v693 = vpop.permute.xlu0 %692
        %v695 = vsel %vm350, %v593, 0
        %v698 = vsel %vm600, %v693, 0
        %700 = vmatprep.subr.bf16.mxu0 0
        %701 = vmatpush1.bf16.msra.mxu0 0
        %702 = vmatprep.subr.bf16.mxu0 0
        %703 = vmatpush1.bf16.msra.mxu0 0
        %704 = vmatprep.subr.bf16.mxu0 0
        %705 = vmatpush1.bf16.msra.mxu0 0
        %706 = vmatprep.subr.bf16.mxu0 0
        %707 = vmatpush1.bf16.msra.mxu0 0
        %708 = vmatprep.subr.bf16.mxu0 0
        %709 = vmatpush1.bf16.msra.mxu0 0
        %710 = vmatprep.subr.bf16.mxu0 0
        %711 = vmatpush1.bf16.msra.mxu0 0
        %712 = vmatprep.subr.bf16.mxu0 0
        %713 = vmatpush1.bf16.msra.mxu0 0
        %714 = vmatprep.subr.bf16.mxu0 0
        %715 = vmatpush1.bf16.msra.mxu0 %v698
        %716 = vmatprep.subr.bf16.mxu0 0
        %717 = vmatpush2.bf16.msra.mxu0 0
        %718 = vmatprep.subr.bf16.mxu0 0
        %719 = vmatpush2.bf16.msra.mxu0 0
        %720 = vmatprep.subr.bf16.mxu0 0
        %721 = vmatpush2.bf16.msra.mxu0 0
        %722 = vmatprep.subr.bf16.mxu0 0
        %723 = vmatpush2.bf16.msra.mxu0 0
        %724 = vmatprep.subr.bf16.mxu0 0
        %725 = vmatpush2.bf16.msra.mxu0 0
        %726 = vmatprep.subr.bf16.mxu0 0
        %727 = vmatpush2.bf16.msra.mxu0 0
        %728 = vmatprep.subr.bf16.mxu0 0
        %729 = vmatpush2.bf16.msra.mxu0 0
        %730 = vmatprep.subr.bf16.mxu0 0
        %731 = vmatpush2.bf16.msra.mxu0 0
        %732 = vmatprep.mubr.bf16.mxu0 0
        %733 = vmatmul.mubr.bf16.gmra.mxu0 %v695
        %v734 = vpop.f32.mrf.mxu0
        %v735 = vadd.f32 0.0, %v734
        %v736 = vpop.f32.mrf.mxu0
        %v737 = vpop.f32.mrf.mxu0
        %v738 = vpop.f32.mrf.mxu0
        %739 = vdwg.mxu0
        %740 = vrot.lane.b32.xlu0 %v498, 64
        %v741 = vpop.permute.xlu0 %740
        %v743 = vsel %vm350, %v594, 0
        %v746 = vsel %vm600, %v741, 0
        %748 = vmatprep.subr.bf16.mxu0 0
        %749 = vmatpush1.bf16.msra.mxu0 0
        %750 = vmatprep.subr.bf16.mxu0 0
        %751 = vmatpush1.bf16.msra.mxu0 0
        %752 = vmatprep.subr.bf16.mxu0 0
        %753 = vmatpush1.bf16.msra.mxu0 0
        %754 = vmatprep.subr.bf16.mxu0 0
        %755 = vmatpush1.bf16.msra.mxu0 0
        %756 = vmatprep.subr.bf16.mxu0 0
        %757 = vmatpush1.bf16.msra.mxu0 0
        %758 = vmatprep.subr.bf16.mxu0 0
        %759 = vmatpush1.bf16.msra.mxu0 0
        %760 = vmatprep.subr.bf16.mxu0 0
        %761 = vmatpush1.bf16.msra.mxu0 0
        %762 = vmatprep.subr.bf16.mxu0 0
        %763 = vmatpush1.bf16.msra.mxu0 %v746
        %764 = vmatprep.subr.bf16.mxu0 0
        %765 = vmatpush2.bf16.msra.mxu0 0
        %766 = vmatprep.subr.bf16.mxu0 0
        %767 = vmatpush2.bf16.msra.mxu0 0
        %768 = vmatprep.subr.bf16.mxu0 0
        %769 = vmatpush2.bf16.msra.mxu0 0
        %770 = vmatprep.subr.bf16.mxu0 0
        %771 = vmatpush2.bf16.msra.mxu0 0
        %772 = vmatprep.subr.bf16.mxu0 0
        %773 = vmatpush2.bf16.msra.mxu0 0
        %774 = vmatprep.subr.bf16.mxu0 0
        %775 = vmatpush2.bf16.msra.mxu0 0
        %776 = vmatprep.subr.bf16.mxu0 0
        %777 = vmatpush2.bf16.msra.mxu0 0
        %778 = vmatprep.subr.bf16.mxu0 0
        %779 = vmatpush2.bf16.msra.mxu0 0
        %780 = vmatprep.mubr.bf16.mxu0 0
        %781 = vmatmul.mubr.bf16.gmra.mxu0 %v743
        %v782 = vpop.f32.mrf.mxu0
        %v783 = vadd.f32 0.0, %v782
        %v784 = vpop.f32.mrf.mxu0
        %v785 = vpop.f32.mrf.mxu0
        %v786 = vpop.f32.mrf.mxu0
        %787 = vdwg.mxu0
        %v788 = vpack.c.bf16 %v639, %v639
        %v789 = vpack.c.bf16 %v687, %v687
        %v790 = vpack.c.bf16 %v735, %v735
        %v791 = vpack.c.bf16 %v783, %v783
        %v792 = vld [vmem:[#allocation8] sm:$0xf]
        %v793 = vld [vmem:[#allocation8 + $0x4] sm:$0xf]
        %v794 = vld [vmem:[#allocation8 + $0x8] sm:$0xf]
        %v795 = vld [vmem:[#allocation8 + $0xc] sm:$0xf]
        %v797 = vsel %vm350, %v788, 0
        %v800 = vsel %vm600, %v792, 0
        %802 = vmatprep.subr.bf16.mxu0 0
        %803 = vmatpush1.bf16.msra.mxu0 0
        %804 = vmatprep.subr.bf16.mxu0 0
        %805 = vmatpush1.bf16.msra.mxu0 0
        %806 = vmatprep.subr.bf16.mxu0 0
        %807 = vmatpush1.bf16.msra.mxu0 0
        %808 = vmatprep.subr.bf16.mxu0 0
        %809 = vmatpush1.bf16.msra.mxu0 0
        %810 = vmatprep.subr.bf16.mxu0 0
        %811 = vmatpush1.bf16.msra.mxu0 0
        %812 = vmatprep.subr.bf16.mxu0 0
        %813 = vmatpush1.bf16.msra.mxu0 0
        %814 = vmatprep.subr.bf16.mxu0 0
        %815 = vmatpush1.bf16.msra.mxu0 0
        %816 = vmatprep.subr.bf16.mxu0 0
        %817 = vmatpush1.bf16.msra.mxu0 %v800
        %818 = vmatprep.subr.bf16.mxu0 0
        %819 = vmatpush2.bf16.msra.mxu0 0
        %820 = vmatprep.subr.bf16.mxu0 0
        %821 = vmatpush2.bf16.msra.mxu0 0
        %822 = vmatprep.subr.bf16.mxu0 0
        %823 = vmatpush2.bf16.msra.mxu0 0
        %824 = vmatprep.subr.bf16.mxu0 0
        %825 = vmatpush2.bf16.msra.mxu0 0
        %826 = vmatprep.subr.bf16.mxu0 0
        %827 = vmatpush2.bf16.msra.mxu0 0
        %828 = vmatprep.subr.bf16.mxu0 0
        %829 = vmatpush2.bf16.msra.mxu0 0
        %830 = vmatprep.subr.bf16.mxu0 0
        %831 = vmatpush2.bf16.msra.mxu0 0
        %832 = vmatprep.subr.bf16.mxu0 0
        %833 = vmatpush2.bf16.msra.mxu0 0
        %834 = vmatprep.mubr.bf16.mxu0 0
        %835 = vmatmul.mubr.bf16.gmra.mxu0 %v797
        %v836 = vpop.f32.mrf.mxu0
        %v837 = vadd.f32 0.0, %v836
        %v838 = vpop.f32.mrf.mxu0
        %v839 = vpop.f32.mrf.mxu0
        %v840 = vpop.f32.mrf.mxu0
        %841 = vdwg.mxu0
        %v843 = vsel %vm350, %v789, 0
        %v846 = vsel %vm600, %v793, 0
        %848 = vmatprep.subr.bf16.mxu0 0
        %849 = vmatpush1.bf16.msra.mxu0 0
        %850 = vmatprep.subr.bf16.mxu0 0
        %851 = vmatpush1.bf16.msra.mxu0 0
        %852 = vmatprep.subr.bf16.mxu0 0
        %853 = vmatpush1.bf16.msra.mxu0 0
        %854 = vmatprep.subr.bf16.mxu0 0
        %855 = vmatpush1.bf16.msra.mxu0 0
        %856 = vmatprep.subr.bf16.mxu0 0
        %857 = vmatpush1.bf16.msra.mxu0 0
        %858 = vmatprep.subr.bf16.mxu0 0
        %859 = vmatpush1.bf16.msra.mxu0 0
        %860 = vmatprep.subr.bf16.mxu0 0
        %861 = vmatpush1.bf16.msra.mxu0 0
        %862 = vmatprep.subr.bf16.mxu0 0
        %863 = vmatpush1.bf16.msra.mxu0 %v846
        %864 = vmatprep.subr.bf16.mxu0 0
        %865 = vmatpush2.bf16.msra.mxu0 0
        %866 = vmatprep.subr.bf16.mxu0 0
        %867 = vmatpush2.bf16.msra.mxu0 0
        %868 = vmatprep.subr.bf16.mxu0 0
        %869 = vmatpush2.bf16.msra.mxu0 0
        %870 = vmatprep.subr.bf16.mxu0 0
        %871 = vmatpush2.bf16.msra.mxu0 0
        %872 = vmatprep.subr.bf16.mxu0 0
        %873 = vmatpush2.bf16.msra.mxu0 0
        %874 = vmatprep.subr.bf16.mxu0 0
        %875 = vmatpush2.bf16.msra.mxu0 0
        %876 = vmatprep.subr.bf16.mxu0 0
        %877 = vmatpush2.bf16.msra.mxu0 0
        %878 = vmatprep.subr.bf16.mxu0 0
        %879 = vmatpush2.bf16.msra.mxu0 0
        %880 = vmatprep.mubr.bf16.mxu0 0
        %881 = vmatmul.mubr.bf16.gmra.mxu0 %v843
        %v882 = vpop.f32.mrf.mxu0
        %v883 = vadd.f32 0.0, %v882
        %v884 = vpop.f32.mrf.mxu0
        %v885 = vpop.f32.mrf.mxu0
        %v886 = vpop.f32.mrf.mxu0
        %887 = vdwg.mxu0
        %v889 = vsel %vm350, %v790, 0
        %v892 = vsel %vm600, %v794, 0
        %894 = vmatprep.subr.bf16.mxu0 0
        %895 = vmatpush1.bf16.msra.mxu0 0
        %896 = vmatprep.subr.bf16.mxu0 0
        %897 = vmatpush1.bf16.msra.mxu0 0
        %898 = vmatprep.subr.bf16.mxu0 0
        %899 = vmatpush1.bf16.msra.mxu0 0
        %900 = vmatprep.subr.bf16.mxu0 0
        %901 = vmatpush1.bf16.msra.mxu0 0
        %902 = vmatprep.subr.bf16.mxu0 0
        %903 = vmatpush1.bf16.msra.mxu0 0
        %904 = vmatprep.subr.bf16.mxu0 0
        %905 = vmatpush1.bf16.msra.mxu0 0
        %906 = vmatprep.subr.bf16.mxu0 0
        %907 = vmatpush1.bf16.msra.mxu0 0
        %908 = vmatprep.subr.bf16.mxu0 0
        %909 = vmatpush1.bf16.msra.mxu0 %v892
        %910 = vmatprep.subr.bf16.mxu0 0
        %911 = vmatpush2.bf16.msra.mxu0 0
        %912 = vmatprep.subr.bf16.mxu0 0
        %913 = vmatpush2.bf16.msra.mxu0 0
        %914 = vmatprep.subr.bf16.mxu0 0
        %915 = vmatpush2.bf16.msra.mxu0 0
        %916 = vmatprep.subr.bf16.mxu0 0
        %917 = vmatpush2.bf16.msra.mxu0 0
        %918 = vmatprep.subr.bf16.mxu0 0
        %919 = vmatpush2.bf16.msra.mxu0 0
        %920 = vmatprep.subr.bf16.mxu0 0
        %921 = vmatpush2.bf16.msra.mxu0 0
        %922 = vmatprep.subr.bf16.mxu0 0
        %923 = vmatpush2.bf16.msra.mxu0 0
        %924 = vmatprep.subr.bf16.mxu0 0
        %925 = vmatpush2.bf16.msra.mxu0 0
        %926 = vmatprep.mubr.bf16.mxu0 0
        %927 = vmatmul.mubr.bf16.gmra.mxu0 %v889
        %v928 = vpop.f32.mrf.mxu0
        %v929 = vadd.f32 0.0, %v928
        %v930 = vpop.f32.mrf.mxu0
        %v931 = vpop.f32.mrf.mxu0
        %v932 = vpop.f32.mrf.mxu0
        %933 = vdwg.mxu0
        %v935 = vsel %vm350, %v791, 0
        %v938 = vsel %vm600, %v795, 0
        %940 = vmatprep.subr.bf16.mxu0 0
        %941 = vmatpush1.bf16.msra.mxu0 0
        %942 = vmatprep.subr.bf16.mxu0 0
        %943 = vmatpush1.bf16.msra.mxu0 0
        %944 = vmatprep.subr.bf16.mxu0 0
        %945 = vmatpush1.bf16.msra.mxu0 0
        %946 = vmatprep.subr.bf16.mxu0 0
        %947 = vmatpush1.bf16.msra.mxu0 0
        %948 = vmatprep.subr.bf16.mxu0 0
        %949 = vmatpush1.bf16.msra.mxu0 0
        %950 = vmatprep.subr.bf16.mxu0 0
        %951 = vmatpush1.bf16.msra.mxu0 0
        %952 = vmatprep.subr.bf16.mxu0 0
        %953 = vmatpush1.bf16.msra.mxu0 0
        %954 = vmatprep.subr.bf16.mxu0 0
        %955 = vmatpush1.bf16.msra.mxu0 %v938
        %956 = vmatprep.subr.bf16.mxu0 0
        %957 = vmatpush2.bf16.msra.mxu0 0
        %958 = vmatprep.subr.bf16.mxu0 0
        %959 = vmatpush2.bf16.msra.mxu0 0
        %960 = vmatprep.subr.bf16.mxu0 0
        %961 = vmatpush2.bf16.msra.mxu0 0
        %962 = vmatprep.subr.bf16.mxu0 0
        %963 = vmatpush2.bf16.msra.mxu0 0
        %964 = vmatprep.subr.bf16.mxu0 0
        %965 = vmatpush2.bf16.msra.mxu0 0
        %966 = vmatprep.subr.bf16.mxu0 0
        %967 = vmatpush2.bf16.msra.mxu0 0
        %968 = vmatprep.subr.bf16.mxu0 0
        %969 = vmatpush2.bf16.msra.mxu0 0
        %970 = vmatprep.subr.bf16.mxu0 0
        %971 = vmatpush2.bf16.msra.mxu0 0
        %972 = vmatprep.mubr.bf16.mxu0 0
        %973 = vmatmul.mubr.bf16.gmra.mxu0 %v935
        %v974 = vpop.f32.mrf.mxu0
        %v975 = vadd.f32 0.0, %v974
        %v976 = vpop.f32.mrf.mxu0
        %v977 = vpop.f32.mrf.mxu0
        %v978 = vpop.f32.mrf.mxu0
        %979 = vdwg.mxu0
        %vm980 = vcmask 261120
        %v981 = vsel %vm980, %v837, 0.0
        %v982 = vsel %vm980, %v883, 0.0
        %v983 = vadd.f32 %v981, %v982
        %v984 = vsel %vm980, %v929, 0.0
        %v985 = vadd.f32 %v983, %v984
        %v986 = vsel %vm980, %v975, 0.0
        %v987 = vadd.f32 %v985, %v986
        %v988 = vld [vmem:[%s3] sm:$0x1]
        %v990 = vlaneseq
        %v991 = vshrl.u32 %v990, 7
        %v992 = vsub.s32 0, %v991
        %v993 = vrot.slane %v988, %v992
        %v995 = vadd.f32 %v987, %v993
        %996 = vst.msk [vmem:[%s255] sm:$0xff] %vm980, %v995
        %s997 = sand.u32 %s133, 1
        %s998 = scalar_lea.sflag [#allocation5], %s997
        %s999 = sand.u32 %s133, 1
        %s1000 = smul.addr %s999, 8
        %s1001 = scalar_lea.vmem [#allocation9], %s1000
        // Predicated region
        $region53: #{tpu_custom_call.1} parent=35 // pred_check
          %p1002 = pneg %p143
        $region54: #{tpu_custom_call.1} parent=35 // pred_check_branch
          %1004 = sbr.rel (%p1002) target = $region56
        $region55: #{tpu_custom_call.1} parent=35 // pred_region
          %s1006 = ssub.s32 128, 128
          %1007 = vsyncadd %s998, %s1006
          %s1008 = sadd.s32 %s27, %s26
          %s1009 = smul.addr %s1008, 128
          %s1010 = scalar_lea.hbm %s4, %s1009
          %s1012 = sshll.u32 %s1001, 4
          %s1013 = int_to_ptr.vmem [resolvable:$true] %s1012
          %1015 = dma.vmem_to_hbm [thread:$0]  %s1013, 128, %s1010, %s998
        $region56: #{tpu_custom_call.1} parent=35 // pred_fallthru
          _
      $region36: #{tpu_custom_call.1} parent=5 // pred_fallthru
        _
      %p1016 = scmp.le.s32.totalorder 2, %s17
      // Predicated region
      $region57: #{tpu_custom_call.1} parent=5 // pred_check
        %p1017 = pneg %p1016
      $region58: #{tpu_custom_call.1} parent=5 // pred_check_branch
        %1019 = sbr.rel (%p1017) target = $region60
      $region59: #{tpu_custom_call.1} parent=5 // pred_region
        %s1020 = ssub.s32 %s17, 2
        // Predicated region
        $region61: #{tpu_custom_call.1} parent=59 // pred_check
          %p1021 = pneg %p149
        $region62: #{tpu_custom_call.1} parent=59 // pred_check_branch
          %1023 = sbr.rel (%p1021) target = $region64
        $region63: #{tpu_custom_call.1} parent=59 // pred_region
          %s1024 = sand.u32 %s134, 1
          %s1025 = scalar_lea.sflag [#allocation5], %s1024
          %s1026 = sand.u32 %s134, 1
          %s1027 = smul.addr %s1026, 8
          %s1028 = scalar_lea.vmem [#allocation9], %s1027
          %1029 = dma.done %s1025, 128
        $region64: #{tpu_custom_call.1} parent=59 // pred_fallthru
          _
      $region60: #{tpu_custom_call.1} parent=5 // pred_fallthru
        _
    $region6: #{tpu_custom_call.1} parent=1 // loop_footer
      %s21 = sadd.s32 1, %s17
    $region7: #{tpu_custom_call.1} parent=1 // loop_footer_branch
      %16 = sbr.rel target = $region3
    $region8: #{tpu_custom_call.1} parent=1 // loop_exit
      _
    %1030 = vsyncpa [#allocation4], 1
    %s1031 = scalar_lea.sflag [#allocation4], 1
    %1032 = vsyncpa %s1031, 1
    %1033 = vsyncpa [#allocation7], 1
    %1034 = vsyncpa [#allocation5], 1
    %s1035 = scalar_lea.sflag [#allocation5], 1
    %1036 = vsyncpa %s1035, 1

</llo_original>
